<compile_context>
chip_gen: v7x
topology: tpu7x:2x2x1
jax: 0.10.0
libtpu: 0.0.40
codegen_flags: <defaults>
</compile_context>

<pallas_src>
import math

import jax
import jax.numpy as jnp
from jax.experimental import pallas as pl
from jax.experimental.pallas import tpu as pltpu


def _sdpa_kernel(inv_temp_ref, q_ref, k_ref, v_ref, out_ref, attn_ref):
    # Blocks: q (1, tq, D), k (1, Lk, D), v (1, Lk, Dv)
    q = q_ref[0]            # (tq, D)
    k = k_ref[0]            # (Lk, D)
    v = v_ref[0]            # (Lk, Dv)

    # Fold 1/temperature into q before the matmul (cheaper than scaling scores).
    qs = (q * inv_temp_ref[0]).astype(q.dtype)

    # Scores: contract the last (feature) dims directly -- no explicit k.T.
    s = jax.lax.dot_general(
        qs, k,
        dimension_numbers=(((1,), (1,)), ((), ())),
        preferred_element_type=jnp.float32)          # (tq, Lk), f32 accumulate

    # Numerically-stable softmax over the Lk axis (dim=2 of the 3-D tensor).
    m = jnp.max(s, axis=-1, keepdims=True)
    e = jnp.exp(s - m)
    denom = jnp.sum(e, axis=-1, keepdims=True)
    p = e * pl.reciprocal(denom, approx=True)        # EUP reciprocal (free slot)

    # Output: (tq, Dv), f32 accumulate on the MXU.
    o = jnp.dot(p.astype(v.dtype), v, preferred_element_type=jnp.float32)

    out_ref[0] = o.astype(out_ref.dtype)
    attn_ref[0] = p.astype(attn_ref.dtype)


def scaled_dot_product_attention(q, k, v, temperature, *, tq_max=512):
    """Returns (output, attn) like the PyTorch module's forward()."""
    B, Lq, D = q.shape
    Bk, Lk, Dk = k.shape
    Bv, Lkv, Dv = v.shape
    assert D == Dk and Bk == B and Bv == B and Lkv == Lk

    # q-tile size: whole Lq for small sequences; otherwise a sublane-aligned
    # tile (tq_max is a multiple of 8). Pad Lq so the grid stays rectangular.
    tq = Lq if Lq <= tq_max else tq_max
    lq_pad = -(-Lq // tq) * tq
    q_in = q if lq_pad == Lq else jnp.pad(q, ((0, 0), (0, lq_pad - Lq), (0, 0)))
    n_q = lq_pad // tq

    # Precompute 1/temperature once on the host side.
    inv_temp = jnp.asarray([1.0 / float(temperature)], dtype=jnp.float32)

    grid_spec = pltpu.PrefetchScalarGridSpec(
        num_scalar_prefetch=0,
        grid=(B, n_q),
        in_specs=[
            pl.BlockSpec(memory_space=pltpu.SMEM),                 # 1/temperature
            pl.BlockSpec((1, tq, D), lambda b, i: (b, i, 0)),      # q tile
            pl.BlockSpec((1, Lk, D), lambda b, i: (b, 0, 0)),      # k (resident over i)
            pl.BlockSpec((1, Lk, Dv), lambda b, i: (b, 0, 0)),     # v (resident over i)
        ],
        out_specs=[
            pl.BlockSpec((1, tq, Dv), lambda b, i: (b, i, 0)),     # output tile
            pl.BlockSpec((1, tq, Lk), lambda b, i: (b, i, 0)),     # attn tile
        ],
    )

    out, attn = pl.pallas_call(
        _sdpa_kernel,
        out_shape=(
            jax.ShapeDtypeStruct((B, lq_pad, Dv), q.dtype),
            jax.ShapeDtypeStruct((B, lq_pad, Lk), q.dtype),
        ),
        grid_spec=grid_spec,
        compiler_params=pltpu.CompilerParams(
            dimension_semantics=("parallel", "parallel"),
            vmem_limit_bytes=48 * 1024 * 1024,
        ),
    )(inv_temp, q_in, k, v)

    if lq_pad != Lq:
        out = out[:, :Lq]
        attn = attn[:, :Lq]
    return out, attn


if __name__ == "__main__":
    key = jax.random.PRNGKey(0)
    kq, kk, kv = jax.random.split(key, 3)

    B, Lq, Lk, D, Dv = 2, 16, 16, 32, 32
    q = jax.random.normal(kq, (B, Lq, D), dtype=jnp.float32)
    k = jax.random.normal(kk, (B, Lk, D), dtype=jnp.float32)
    v = jax.random.normal(kv, (B, Lk, Dv), dtype=jnp.float32)
    temperature = math.sqrt(D)

    # Plain-JAX reference.
    s_ref = jnp.einsum("bqd,bkd->bqk", q, k) / temperature
    a_ref = jax.nn.softmax(s_ref, axis=2)
    o_ref = jnp.einsum("bqk,bkd->bqd", a_ref, v)

    # Single q-tile path (tq == Lq).
    out, attn = scaled_dot_product_attention(q, k, v, temperature)
    jax.block_until_ready((out, attn))
    # Tolerance loosened slightly for the approx (EUP) softmax reciprocal.
    assert jnp.allclose(attn, a_ref, atol=2e-3, rtol=2e-3)
    assert jnp.allclose(out, o_ref, atol=2e-3, rtol=2e-3)

    # Multi-tile path (Lq split into tq=8 tiles) to exercise the Lq grid axis.
    out_t, attn_t = scaled_dot_product_attention(q, k, v, temperature, tq_max=8)
    jax.block_until_ready((out_t, attn_t))
    assert jnp.allclose(attn_t, a_ref, atol=2e-3, rtol=2e-3)
    assert jnp.allclose(out_t, o_ref, atol=2e-3, rtol=2e-3)

    print("KERNEL_OK")
</pallas_src>

<mosaic_0001>
module attributes {stable_mosaic.version = 11 : i64} {
  func.func @_sdpa_kernel(%arg0: i32, %arg1: i32, %arg2: memref<1xf32, #tpu.memory_space<smem>>, %arg3: memref<1x16x32xf32, #tpu.memory_space<vmem>>, %arg4: memref<1x16x32xf32, #tpu.memory_space<vmem>>, %arg5: memref<1x16x32xf32, #tpu.memory_space<vmem>>, %arg6: memref<1x16x32xf32, #tpu.memory_space<vmem>>, %arg7: memref<1x16x16xf32, #tpu.memory_space<vmem>>) attributes {dimension_semantics = [#tpu.dimension_semantics<parallel>, #tpu.dimension_semantics<parallel>], iteration_bounds = array<i64: 2, 1>, scalar_prefetch = 0 : i64, scratch_operands = 0 : i64, tpu.core_type = #tpu.core_type<tc>, window_params = [{transform_indices = @transform_0, window_bounds = array<i64: 1>}, {transform_indices = @transform_1, window_bounds = array<i64: 1, 16, 32>}, {transform_indices = @transform_2, window_bounds = array<i64: 1, 16, 32>}, {transform_indices = @transform_3, window_bounds = array<i64: 1, 16, 32>}, {transform_indices = @transform_4, window_bounds = array<i64: 1, 16, 32>}, {transform_indices = @transform_5, window_bounds = array<i64: 1, 16, 16>}]} {
    %c0 = arith.constant 0 : index
    %c0_0 = arith.constant 0 : index
    %c0_1 = arith.constant 0 : index
    %0 = vector.load %arg3[%c0, %c0_0, %c0_1] : memref<1x16x32xf32, #tpu.memory_space<vmem>>, vector<1x16x32xf32>
    %1 = vector.shape_cast %0 : vector<1x16x32xf32> to vector<16x32xf32>
    %c0_2 = arith.constant 0 : index
    %c0_3 = arith.constant 0 : index
    %c0_4 = arith.constant 0 : index
    %2 = vector.load %arg4[%c0_2, %c0_3, %c0_4] : memref<1x16x32xf32, #tpu.memory_space<vmem>>, vector<1x16x32xf32>
    %3 = vector.shape_cast %2 : vector<1x16x32xf32> to vector<16x32xf32>
    %c0_5 = arith.constant 0 : index
    %c0_6 = arith.constant 0 : index
    %c0_7 = arith.constant 0 : index
    %4 = vector.load %arg5[%c0_5, %c0_6, %c0_7] : memref<1x16x32xf32, #tpu.memory_space<vmem>>, vector<1x16x32xf32>
    %5 = vector.shape_cast %4 : vector<1x16x32xf32> to vector<16x32xf32>
    %c0_8 = arith.constant 0 : index
    %6 = memref.load %arg2[%c0_8] : memref<1xf32, #tpu.memory_space<smem>>
    %7 = vector.broadcast %6 : f32 to vector<16x32xf32>
    %8 = arith.mulf %1, %7 : vector<16x32xf32>
    %cst = arith.constant dense<0.000000e+00> : vector<16x16xf32>
    %9 = tpu.matmul %8, %3, %cst {dimension_numbers = #tpu.dot_dimension_numbers<[1], [1], [0], [0], [0, 0, 1, 0], [], []>} : vector<16x32xf32>, vector<16x32xf32>, vector<16x16xf32> -> vector<16x16xf32>
    %cst_9 = arith.constant dense<0xFF800000> : vector<16xf32>
    %10 = vector.multi_reduction <maximumf>, %9, %cst_9 [1] : vector<16x16xf32> to vector<16xf32>
    %11 = vector.shape_cast %10 : vector<16xf32> to vector<16x1xf32>
    %12 = vector.broadcast %11 : vector<16x1xf32> to vector<16x16xf32>
    %13 = arith.subf %9, %12 : vector<16x16xf32>
    %14 = math.exp %13 : vector<16x16xf32>
    %cst_10 = arith.constant dense<0.000000e+00> : vector<16xf32>
    %15 = vector.multi_reduction <add>, %14, %cst_10 [1] : vector<16x16xf32> to vector<16xf32>
    %16 = vector.shape_cast %15 : vector<16xf32> to vector<16x1xf32>
    %17 = tpu.reciprocal %16 {approx = true} : vector<16x1xf32> -> vector<16x1xf32>
    %18 = vector.broadcast %17 : vector<16x1xf32> to vector<16x16xf32>
    %19 = arith.mulf %14, %18 : vector<16x16xf32>
    %cst_11 = arith.constant dense<0.000000e+00> : vector<16x32xf32>
    %20 = tpu.matmul %19, %5, %cst_11 {dimension_numbers = #tpu.dot_dimension_numbers<[1], [0], [0], [1], [0, 0, 1, 1], [], []>} : vector<16x16xf32>, vector<16x32xf32>, vector<16x32xf32> -> vector<16x32xf32>
    %c0_12 = arith.constant 0 : index
    %c0_13 = arith.constant 0 : index
    %c0_14 = arith.constant 0 : index
    %21 = vector.load %arg6[%c0_12, %c0_13, %c0_14] : memref<1x16x32xf32, #tpu.memory_space<vmem>>, vector<1x16x32xf32>
    %22 = vector.shape_cast %21 : vector<1x16x32xf32> to vector<16x32xf32>
    %23 = vector.shape_cast %20 : vector<16x32xf32> to vector<1x16x32xf32>
    tpu.vector_store %arg6[%c0_12, %c0_13, %c0_14], %23 {strides = array<i32>} : memref<1x16x32xf32, #tpu.memory_space<vmem>>, vector<1x16x32xf32>,
    %c0_15 = arith.constant 0 : index
    %c0_16 = arith.constant 0 : index
    %c0_17 = arith.constant 0 : index
    %24 = vector.load %arg7[%c0_15, %c0_16, %c0_17] : memref<1x16x16xf32, #tpu.memory_space<vmem>>, vector<1x16x16xf32>
    %25 = vector.shape_cast %24 : vector<1x16x16xf32> to vector<16x16xf32>
    %26 = vector.shape_cast %19 : vector<16x16xf32> to vector<1x16x16xf32>
    tpu.vector_store %arg7[%c0_15, %c0_16, %c0_17], %26 {strides = array<i32>} : memref<1x16x16xf32, #tpu.memory_space<vmem>>, vector<1x16x16xf32>,
    return
  }
  func.func @transform_0(%arg0: i32, %arg1: i32) -> i32 {
    %c0_i32 = arith.constant 0 : i32
    %c0_i32_0 = arith.constant 0 : i32
    return %c0_i32 : i32
  }
  func.func @transform_1(%arg0: i32, %arg1: i32) -> (i32, i32, i32) {
    %c0_i32 = arith.constant 0 : i32
    %c0_i32_0 = arith.constant 0 : i32
    return %arg0, %arg1, %c0_i32 : i32, i32, i32
  }
  func.func @transform_2(%arg0: i32, %arg1: i32) -> (i32, i32, i32) {
    %c0_i32 = arith.constant 0 : i32
    %c0_i32_0 = arith.constant 0 : i32
    %c0_i32_1 = arith.constant 0 : i32
    return %arg0, %c0_i32, %c0_i32_0 : i32, i32, i32
  }
  func.func @transform_3(%arg0: i32, %arg1: i32) -> (i32, i32, i32) {
    %c0_i32 = arith.constant 0 : i32
    %c0_i32_0 = arith.constant 0 : i32
    %c0_i32_1 = arith.constant 0 : i32
    return %arg0, %c0_i32, %c0_i32_0 : i32, i32, i32
  }
  func.func @transform_4(%arg0: i32, %arg1: i32) -> (i32, i32, i32) {
    %c0_i32 = arith.constant 0 : i32
    %c0_i32_0 = arith.constant 0 : i32
    return %arg0, %arg1, %c0_i32 : i32, i32, i32
  }
  func.func @transform_5(%arg0: i32, %arg1: i32) -> (i32, i32, i32) {
    %c0_i32 = arith.constant 0 : i32
    %c0_i32_0 = arith.constant 0 : i32
    return %arg0, %arg1, %c0_i32 : i32, i32, i32
  }
}

</mosaic_0001>

<llo_original>
// kernel: tpu_custom_call.1
$region0: #{tpu_custom_call.1}
  #allocation0 [shape = 'u32[]', space=smem, size = 0x4, offset = 0x4, fixed_abs, tag = 'smem constant byte address 0x4 - core index']
  #allocation1 [shape = 'u32[144,128]{1,0:T(1,128)}', space=vmem, size = 0x12000, scoped, tag = 'internal scratch']
  #allocation2 [shape = 'f32[1]{0:T(128)S(6)}', space=smem, size = 0x200, scoped, tag = 'scoped memory for tpu_custom_call.1']
  %s0 = inlined_call_operand.<no memory space> [shape: f32[1], index: 0, kind: input, shape index: {}]
  %s1 = inlined_call_operand.hbm [shape: f32[2,16,32], index: 1, kind: input, shape index: {}]
  %s2 = inlined_call_operand.hbm [shape: f32[2,16,32], index: 2, kind: input, shape index: {}]
  %s3 = inlined_call_operand.hbm [shape: f32[2,16,32], index: 3, kind: input, shape index: {}]
  %s4 = inlined_call_operand.hbm [shape: f32[2,16,32], index: 4, kind: output, shape index: {0}]
  %s5 = inlined_call_operand.hbm [shape: f32[2,16,16], index: 5, kind: output, shape index: {1}]
  %6 = xla_tuple %s4, %s5
  %s7 = sld [smem:[#allocation0]]
  $region69: #{tpu_custom_call.1} parent=0
    _
  %s9 = ssub.s32 1, %s7
  %s10 = scalar_select 0, %s9, %s7
  %11 = sst [smem:[#allocation2]] %s0
  $region1: #{tpu_custom_call.1} parent=0
    #allocation3 [shape = 'u8[16384]{0}', space=vmem, size = 0x4000, scoped, tag = 'input window, operand 1']
    #allocation4 [shape = 's32[2]{0}', space=sflag, size = 0x8, scoped, tag = 'scoped memory for tpu_custom_call.1']
    #allocation5 [shape = 's32[2]{0}', space=sflag, size = 0x8, scoped, tag = 'scoped memory for tpu_custom_call.1']
    #allocation6 [shape = 'u8[16384]{0}', space=vmem, size = 0x4000, scoped, tag = 'input window, operand 2']
    #allocation7 [shape = 's32[2]{0}', space=sflag, size = 0x8, scoped, tag = 'scoped memory for tpu_custom_call.1']
    #allocation8 [shape = 'u8[16384]{0}', space=vmem, size = 0x4000, scoped, tag = 'input window, operand 3']
    #allocation9 [shape = 'u8[16384]{0}', space=vmem, size = 0x4000, scoped, tag = 'output window, operand 0']
    #allocation10 [shape = 'u8[16384]{0}', space=vmem, size = 0x4000, scoped, tag = 'output window, operand 1']
    #allocation11 [shape = 's32[2]{0}', space=sflag, size = 0x8, scoped, tag = 'scoped memory for tpu_custom_call.1']
    %12 = vsyncpa [#allocation4], 0
    %s13 = scalar_lea.sflag [#allocation4], 1
    %14 = vsyncpa %s13, 0
    %15 = vsyncpa [#allocation7], 0
    %s16 = scalar_lea.sflag [#allocation7], 1
    %17 = vsyncpa %s16, 0
    %18 = vsyncpa [#allocation5], 0
    %s19 = scalar_lea.sflag [#allocation5], 1
    %20 = vsyncpa %s19, 0
    %21 = vsyncpa [#allocation11], 0
    %s22 = scalar_lea.sflag [#allocation11], 1
    %23 = vsyncpa %s22, 0
    loop: start=0, step=1, limit=4
    $region2: #{tpu_custom_call.1} parent=1 // loop_pre_header
      _
    $region3: #{tpu_custom_call.1} parent=1 // loop_header
      %s25 = sphi 0, %s29
      %p26 = scmp.ge.s32.totalorder %s25, 4
      %s32 = sphi 0, %s44
      %s33 = sphi 0, %s40
      %s34 = sphi 0, %s32
      %s35 = sphi 0, %s33
      %s36 = sphi 0, %s34
      %s37 = sphi 0, %s35
      %s45 = sphi 0, %s45
      %s47 = sphi 0, %s45
      %s48 = sphi 0, %s47
      %s62 = sphi 0, %s48
      %s70 = sphi 0, %s72
      %s73 = sphi 0, %s70
      %s74 = sphi 0, %s73
      %s90 = sphi 0, %s74
      %s96 = sphi 0, %s98
      %s99 = sphi 0, %s96
      %s100 = sphi 0, %s99
      %s116 = sphi 0, %s100
      %s122 = sphi 0, %s124
      %s125 = sphi 0, %s122
      %s126 = sphi 0, %s125
      %s142 = sphi 0, %s126
      %s150 = sphi 0, %s152
      %s153 = sphi 0, %s150
      %s154 = sphi 0, %s153
      %s170 = sphi 0, %s154
      %s178 = sphi 0, %s180
      %s181 = sphi 0, %s178
      %s182 = sphi 0, %s181
      %s198 = sphi 0, %s182
    $region4: #{tpu_custom_call.1} parent=1 // loop_header_branch
      %28 = sbr.rel (%p26) target = $region8
    $region5: #{tpu_custom_call.1} parent=1 // loop_body
      %s30 = ssub.s32 %s25, 1
      %s31 = ssub.s32 %s25, 2
      %s38 = sadd.s32 1, %s33
      %p39 = scmp.ge.s32.totalorder %s38, 1
      %s40 = scalar_select %p39, 0, %s38
      %s41 = sadd.s32 1, %s32
      %s42 = scalar_select %p39, %s41, %s32
      %p43 = scmp.ge.s32.totalorder %s42, 2
      %s44 = scalar_select %p43, 0, %s42
      %s46 = sadd.s32 %s45, 1
      %p49 = scmp.eq.s32.totalorder %s25, 1
      %p50 = scmp.ne.s32.totalorder %s45, %s47
      %p51 = scmp.eq.s32.totalorder %s25, 0
      %p52 = por %p50, %p51
      %p53 = scmp.ne.s32.totalorder %s45, %s47
      %p54 = scmp.eq.s32.totalorder %s30, 1
      %p55 = por %p53, %p54
      %p56 = scmp.ne.s32.totalorder %s47, %s48
      %p57 = scmp.eq.s32.totalorder %s30, 0
      %p58 = por %p56, %p57
      %p59 = scmp.ne.s32.totalorder %s47, %s48
      %p60 = scmp.eq.s32.totalorder %s31, 1
      %p61 = por %p59, %p60
      %p63 = scmp.ne.s32.totalorder %s48, %s62
      %p64 = scmp.eq.s32.totalorder %s31, 0
      %p65 = por %p63, %p64
      %s66 = ssub.s32 %s32, %s44
      %s67 = ssub.s32 %s33, %s40
      %s68 = sor.u32 %s66, %s67
      %p69 = scmp.eq.s32.totalorder %s68, 0
      %s71 = sadd.s32 %s70, 1
      %s72 = scalar_select %p69, %s70, %s71
      %p75 = pneg %p69
      %p76 = scmp.eq.s32.totalorder %s25, 1
      %p77 = por %p75, %p76
      %p78 = scmp.ne.s32.totalorder %s70, %s73
      %p79 = scmp.eq.s32.totalorder %s25, 0
      %p80 = por %p78, %p79
      %p81 = scmp.ne.s32.totalorder %s70, %s73
      %p82 = scmp.eq.s32.totalorder %s30, 1
      %p83 = por %p81, %p82
      %p84 = scmp.ne.s32.totalorder %s73, %s74
      %p85 = scmp.eq.s32.totalorder %s30, 0
      %p86 = por %p84, %p85
      %p87 = scmp.ne.s32.totalorder %s73, %s74
      %p88 = scmp.eq.s32.totalorder %s31, 1
      %p89 = por %p87, %p88
      %p91 = scmp.ne.s32.totalorder %s74, %s90
      %p92 = scmp.eq.s32.totalorder %s31, 0
      %p93 = por %p91, %p92
      %s94 = ssub.s32 %s32, %s44
      %p95 = scmp.eq.s32.totalorder %s94, 0
      %s97 = sadd.s32 %s96, 1
      %s98 = scalar_select %p95, %s96, %s97
      %p101 = pneg %p95
      %p102 = scmp.eq.s32.totalorder %s25, 1
      %p103 = por %p101, %p102
      %p104 = scmp.ne.s32.totalorder %s96, %s99
      %p105 = scmp.eq.s32.totalorder %s25, 0
      %p106 = por %p104, %p105
      %p107 = scmp.ne.s32.totalorder %s96, %s99
      %p108 = scmp.eq.s32.totalorder %s30, 1
      %p109 = por %p107, %p108
      %p110 = scmp.ne.s32.totalorder %s99, %s100
      %p111 = scmp.eq.s32.totalorder %s30, 0
      %p112 = por %p110, %p111
      %p113 = scmp.ne.s32.totalorder %s99, %s100
      %p114 = scmp.eq.s32.totalorder %s31, 1
      %p115 = por %p113, %p114
      %p117 = scmp.ne.s32.totalorder %s100, %s116
      %p118 = scmp.eq.s32.totalorder %s31, 0
      %p119 = por %p117, %p118
      %s120 = ssub.s32 %s32, %s44
      %p121 = scmp.eq.s32.totalorder %s120, 0
      %s123 = sadd.s32 %s122, 1
      %s124 = scalar_select %p121, %s122, %s123
      %p127 = pneg %p121
      %p128 = scmp.eq.s32.totalorder %s25, 1
      %p129 = por %p127, %p128
      %p130 = scmp.ne.s32.totalorder %s122, %s125
      %p131 = scmp.eq.s32.totalorder %s25, 0
      %p132 = por %p130, %p131
      %p133 = scmp.ne.s32.totalorder %s122, %s125
      %p134 = scmp.eq.s32.totalorder %s30, 1
      %p135 = por %p133, %p134
      %p136 = scmp.ne.s32.totalorder %s125, %s126
      %p137 = scmp.eq.s32.totalorder %s30, 0
      %p138 = por %p136, %p137
      %p139 = scmp.ne.s32.totalorder %s125, %s126
      %p140 = scmp.eq.s32.totalorder %s31, 1
      %p141 = por %p139, %p140
      %p143 = scmp.ne.s32.totalorder %s126, %s142
      %p144 = scmp.eq.s32.totalorder %s31, 0
      %p145 = por %p143, %p144
      %s146 = ssub.s32 %s32, %s44
      %s147 = ssub.s32 %s33, %s40
      %s148 = sor.u32 %s146, %s147
      %p149 = scmp.eq.s32.totalorder %s148, 0
      %s151 = sadd.s32 %s150, 1
      %s152 = scalar_select %p149, %s150, %s151
      %p155 = pneg %p149
      %p156 = scmp.eq.s32.totalorder %s25, 1
      %p157 = por %p155, %p156
      %p158 = scmp.ne.s32.totalorder %s150, %s153
      %p159 = scmp.eq.s32.totalorder %s25, 0
      %p160 = por %p158, %p159
      %p161 = scmp.ne.s32.totalorder %s150, %s153
      %p162 = scmp.eq.s32.totalorder %s30, 1
      %p163 = por %p161, %p162
      %p164 = scmp.ne.s32.totalorder %s153, %s154
      %p165 = scmp.eq.s32.totalorder %s30, 0
      %p166 = por %p164, %p165
      %p167 = scmp.ne.s32.totalorder %s153, %s154
      %p168 = scmp.eq.s32.totalorder %s31, 1
      %p169 = por %p167, %p168
      %p171 = scmp.ne.s32.totalorder %s154, %s170
      %p172 = scmp.eq.s32.totalorder %s31, 0
      %p173 = por %p171, %p172
      %s174 = ssub.s32 %s32, %s44
      %s175 = ssub.s32 %s33, %s40
      %s176 = sor.u32 %s174, %s175
      %p177 = scmp.eq.s32.totalorder %s176, 0
      %s179 = sadd.s32 %s178, 1
      %s180 = scalar_select %p177, %s178, %s179
      %p183 = pneg %p177
      %p184 = scmp.eq.s32.totalorder %s25, 1
      %p185 = por %p183, %p184
      %p186 = scmp.ne.s32.totalorder %s178, %s181
      %p187 = scmp.eq.s32.totalorder %s25, 0
      %p188 = por %p186, %p187
      %p189 = scmp.ne.s32.totalorder %s178, %s181
      %p190 = scmp.eq.s32.totalorder %s30, 1
      %p191 = por %p189, %p190
      %p192 = scmp.ne.s32.totalorder %s181, %s182
      %p193 = scmp.eq.s32.totalorder %s30, 0
      %p194 = por %p192, %p193
      %p195 = scmp.ne.s32.totalorder %s181, %s182
      %p196 = scmp.eq.s32.totalorder %s31, 1
      %p197 = por %p195, %p196
      %p199 = scmp.ne.s32.totalorder %s182, %s198
      %p200 = scmp.eq.s32.totalorder %s31, 0
      %p201 = por %p199, %p200
      %p202 = scmp.le.s32.totalorder 1, %s25
      %p203 = scmp.lt.s32.totalorder %s25, 3
      %p204 = pnand %p202, %p203
      %p205 = pneg %p204
      // Predicated region
      $region9: #{tpu_custom_call.1} parent=5 // pred_check
        _
      $region10: #{tpu_custom_call.1} parent=5 // pred_check_branch
        %207 = sbr.rel (%p204) target = $region12
      $region11: #{tpu_custom_call.1} parent=5 // pred_region
        %s208 = ssub.s32 %s25, 1
        // Predicated region
        $region13: #{tpu_custom_call.1} parent=11 // pred_check
          %p209 = pneg %p58
        $region14: #{tpu_custom_call.1} parent=11 // pred_check_branch
          %211 = sbr.rel (%p209) target = $region16
        $region15: #{tpu_custom_call.1} parent=11 // pred_region
          _
        $region16: #{tpu_custom_call.1} parent=11 // pred_fallthru
          _
      $region12: #{tpu_custom_call.1} parent=5 // pred_fallthru
        _
      %p212 = scmp.lt.s32.totalorder %s25, 2
      // Predicated region
      $region17: #{tpu_custom_call.1} parent=5 // pred_check
        %p213 = pneg %p212
      $region18: #{tpu_custom_call.1} parent=5 // pred_check_branch
        %215 = sbr.rel (%p213) target = $region20
      $region19: #{tpu_custom_call.1} parent=5 // pred_region
        // Predicated region
        $region21: #{tpu_custom_call.1} parent=19 // pred_check
          %p216 = pneg %p80
        $region22: #{tpu_custom_call.1} parent=19 // pred_check_branch
          %218 = sbr.rel (%p216) target = $region24
        $region23: #{tpu_custom_call.1} parent=19 // pred_region
          %s219 = sand.u32 %s70, 1
          %s220 = scalar_lea.sflag [#allocation4], %s219
          %s221 = sand.u32 %s70, 1
          %s222 = smul.addr %s221, 16
          %s223 = scalar_lea.vmem [#allocation3], %s222
          %s224 = smul.u32 2, %s33
          %s226 = ssub.s32 256, 256
          %227 = vsyncadd %s220, %s226
          %s228 = smul.addr %s32, 2
          %s229 = sadd.s32 %s224, %s228
          %s230 = smul.addr %s229, 128
          %s231 = scalar_lea.hbm %s1, %s230
          %s232 = sshll.u32 %s223, 4
          %s233 = int_to_ptr.vmem [resolvable:$true] %s232
          %238 = dma.hbm_to_vmem [thread:$0]  %s231, 256, %s233, %s220, 128, 128, 8
        $region24: #{tpu_custom_call.1} parent=19 // pred_fallthru
          _
        // Predicated region
        $region25: #{tpu_custom_call.1} parent=19 // pred_check
          %p239 = pneg %p106
        $region26: #{tpu_custom_call.1} parent=19 // pred_check_branch
          %241 = sbr.rel (%p239) target = $region28
        $region27: #{tpu_custom_call.1} parent=19 // pred_region
          %s242 = sand.u32 %s25, 1
          %s243 = scalar_lea.sflag [#allocation7], %s242
          %s244 = sand.u32 %s96, 1
          %s245 = smul.addr %s244, 16
          %s246 = scalar_lea.vmem [#allocation6], %s245
          %s248 = ssub.s32 256, 256
          %249 = vsyncadd %s243, %s248
          %s250 = smul.addr %s32, 2
          %s251 = smul.addr %s250, 128
          %s252 = scalar_lea.hbm %s2, %s251
          %s253 = sshll.u32 %s246, 4
          %s254 = int_to_ptr.vmem [resolvable:$true] %s253
          %259 = dma.hbm_to_vmem [thread:$0]  %s252, 256, %s254, %s243, 128, 128, 8
        $region28: #{tpu_custom_call.1} parent=19 // pred_fallthru
          _
        // Predicated region
        $region29: #{tpu_custom_call.1} parent=19 // pred_check
          %p260 = pneg %p132
        $region30: #{tpu_custom_call.1} parent=19 // pred_check_branch
          %262 = sbr.rel (%p260) target = $region32
        $region31: #{tpu_custom_call.1} parent=19 // pred_region
          %s263 = sand.u32 %s25, 1
          %s264 = scalar_lea.sflag [#allocation7], %s263
          %s265 = sand.u32 %s122, 1
          %s266 = smul.addr %s265, 16
          %s267 = scalar_lea.vmem [#allocation8], %s266
          %s269 = ssub.s32 256, 256
          %270 = vsyncadd %s264, %s269
          %s271 = smul.addr %s32, 2
          %s272 = smul.addr %s271, 128
          %s273 = scalar_lea.hbm %s3, %s272
          %s274 = sshll.u32 %s267, 4
          %s275 = int_to_ptr.vmem [resolvable:$true] %s274
          %280 = dma.hbm_to_vmem [thread:$0]  %s273, 256, %s275, %s264, 128, 128, 8
        $region32: #{tpu_custom_call.1} parent=19 // pred_fallthru
          _
      $region20: #{tpu_custom_call.1} parent=5 // pred_fallthru
        _
      %p281 = scmp.le.s32.totalorder 1, %s25
      %p282 = scmp.lt.s32.totalorder %s25, 3
      %p283 = pnand %p281, %p282
      %p284 = pneg %p283
      // Predicated region
      $region33: #{tpu_custom_call.1} parent=5 // pred_check
        _
      $region34: #{tpu_custom_call.1} parent=5 // pred_check_branch
        %286 = sbr.rel (%p283) target = $region36
      $region35: #{tpu_custom_call.1} parent=5 // pred_region
        %s287 = ssub.s32 %s25, 1
        %s288 = sand.u32 %s73, 1
        %s289 = scalar_lea.sflag [#allocation4], %s288
        %s290 = sand.u32 %s73, 1
        %s291 = smul.addr %s290, 16
        %s292 = scalar_lea.vmem [#allocation3], %s291
        // Predicated region
        $region37: #{tpu_custom_call.1} parent=35 // pred_check
          %p293 = pneg %p86
        $region38: #{tpu_custom_call.1} parent=35 // pred_check_branch
          %295 = sbr.rel (%p293) target = $region40
        $region39: #{tpu_custom_call.1} parent=35 // pred_region
          %296 = dma.done %s289, 256
        $region40: #{tpu_custom_call.1} parent=35 // pred_fallthru
          _
        %s297 = sand.u32 %s30, 1
        %s298 = scalar_lea.sflag [#allocation7], %s297
        %s299 = sand.u32 %s99, 1
        %s300 = smul.addr %s299, 16
        %s301 = scalar_lea.vmem [#allocation6], %s300
        // Predicated region
        $region41: #{tpu_custom_call.1} parent=35 // pred_check
          %p302 = pneg %p112
        $region42: #{tpu_custom_call.1} parent=35 // pred_check_branch
          %304 = sbr.rel (%p302) target = $region44
        $region43: #{tpu_custom_call.1} parent=35 // pred_region
          %305 = dma.done %s298, 256
        $region44: #{tpu_custom_call.1} parent=35 // pred_fallthru
          _
        %s306 = sand.u32 %s30, 1
        %s307 = scalar_lea.sflag [#allocation7], %s306
        %s308 = sand.u32 %s125, 1
        %s309 = smul.addr %s308, 16
        %s310 = scalar_lea.vmem [#allocation8], %s309
        // Predicated region
        $region45: #{tpu_custom_call.1} parent=35 // pred_check
          %p311 = pneg %p138
        $region46: #{tpu_custom_call.1} parent=35 // pred_check_branch
          %313 = sbr.rel (%p311) target = $region48
        $region47: #{tpu_custom_call.1} parent=35 // pred_region
          %314 = dma.done %s307, 256
        $region48: #{tpu_custom_call.1} parent=35 // pred_fallthru
          _
        %p315 = pneg %p58
        %p316 = pneg %p55
        %s317 = sand.u32 %s73, 1
        %s318 = scalar_lea.sflag [#allocation4], %s317
        %s319 = sand.u32 %s73, 1
        %s320 = smul.addr %s319, 16
        %s321 = scalar_lea.vmem [#allocation3], %s320
        %p322 = pneg %p86
        %p323 = pneg %p83
        %s324 = sand.u32 %s30, 1
        %s325 = scalar_lea.sflag [#allocation7], %s324
        %s326 = sand.u32 %s99, 1
        %s327 = smul.addr %s326, 16
        %s328 = scalar_lea.vmem [#allocation6], %s327
        %p329 = pneg %p112
        %p330 = pneg %p109
        %s331 = sand.u32 %s30, 1
        %s332 = scalar_lea.sflag [#allocation7], %s331
        %s333 = sand.u32 %s125, 1
        %s334 = smul.addr %s333, 16
        %s335 = scalar_lea.vmem [#allocation8], %s334
        %p336 = pneg %p138
        %p337 = pneg %p135
        %p338 = pneg %p166
        %p339 = pneg %p163
        %s340 = sand.u32 %s153, 1
        %s341 = scalar_lea.sflag [#allocation5], %s340
        %s342 = sand.u32 %s153, 1
        %s343 = smul.addr %s342, 16
        %s344 = scalar_lea.vmem [#allocation9], %s343
        %p345 = pneg %p194
        %p346 = pneg %p191
        %s347 = sand.u32 %s181, 1
        %s348 = scalar_lea.sflag [#allocation11], %s347
        %s349 = sand.u32 %s181, 1
        %s350 = smul.addr %s349, 16
        %s351 = scalar_lea.vmem [#allocation10], %s350
        %s352 = smul.u32 2, %s35
        %s353 = smul.u32 2, %s35
        %s354 = smul.u32 2, %s35
        %v355 = vld [vmem:[%s292] sm:$0xff]
        %v356 = vld [vmem:[%s292 + $0x8] sm:$0xff]
        %v357 = vld [vmem:[%s301] sm:$0xff]
        %v358 = vld [vmem:[%s301 + $0x8] sm:$0xff]
        %v359 = vld [vmem:[%s310] sm:$0xff]
        %v360 = vld [vmem:[%s310 + $0x8] sm:$0xff]
        %s361 = sld [smem:[#allocation2]]
        %v362 = vstv %s361
        %v363 = vmul.f32 %v355, %v362
        %v364 = vmul.f32 %v356, %v362
        %vm365 = vcmask 261120
        %v367 = vsel %vm365, %v363, 0
        %v370 = vsel %vm365, %v364, 0
        %v373 = vsel %vm365, %v357, 0
        %v376 = vsel %vm365, %v358, 0
        %378 = vmatprep.subr.mxu0 0.0
        %379 = vmatpush1.xpose.msra.mxu0 %v373
        %380 = vmatprep.subr.mxu0 0.0
        %381 = vmatpush1.xpose.msra.mxu0 %v376
        %382 = vmatprep.subr.mxu0 0.0
        %383 = vmatpush1.xpose.msra.mxu0 0.0
        %384 = vmatprep.subr.mxu0 0.0
        %385 = vmatpush1.xpose.msra.mxu0 0.0
        %386 = vmatprep.subr.mxu0 0.0
        %387 = vmatpush1.xpose.msra.mxu0 0.0
        %388 = vmatprep.subr.mxu0 0.0
        %389 = vmatpush1.xpose.msra.mxu0 0.0
        %390 = vmatprep.subr.mxu0 0.0
        %391 = vmatpush1.xpose.msra.mxu0 0.0
        %392 = vmatprep.subr.mxu0 0.0
        %393 = vmatpush1.xpose.msra.mxu0 0.0
        %394 = vmatprep.subr.mxu0 0.0
        %395 = vmatpush1.xpose.msra.mxu0 0.0
        %396 = vmatprep.subr.mxu0 0.0
        %397 = vmatpush1.xpose.msra.mxu0 0.0
        %398 = vmatprep.subr.mxu0 0.0
        %399 = vmatpush1.xpose.msra.mxu0 0.0
        %400 = vmatprep.subr.mxu0 0.0
        %401 = vmatpush1.xpose.msra.mxu0 0.0
        %402 = vmatprep.subr.mxu0 0.0
        %403 = vmatpush1.xpose.msra.mxu0 0.0
        %404 = vmatprep.subr.mxu0 0.0
        %405 = vmatpush1.xpose.msra.mxu0 0.0
        %406 = vmatprep.subr.mxu0 0.0
        %407 = vmatpush1.xpose.msra.mxu0 0.0
        %408 = vmatprep.subr.mxu0 0.0
        %409 = vmatpush1.xpose.msra.mxu0 0.0
        %410 = vmatprep.subr.mxu0 0.0
        %411 = vmatpush1.xpose.msra.mxu0 0.0
        %412 = vmatprep.subr.mxu0 0.0
        %413 = vmatpush1.xpose.msra.mxu0 0.0
        %414 = vmatprep.subr.mxu0 0.0
        %415 = vmatpush1.xpose.msra.mxu0 0.0
        %416 = vmatprep.subr.mxu0 0.0
        %417 = vmatpush1.xpose.msra.mxu0 0.0
        %418 = vmatprep.subr.mxu0 0.0
        %419 = vmatpush1.xpose.msra.mxu0 0.0
        %420 = vmatprep.subr.mxu0 0.0
        %421 = vmatpush1.xpose.msra.mxu0 0.0
        %422 = vmatprep.subr.mxu0 0.0
        %423 = vmatpush1.xpose.msra.mxu0 0.0
        %424 = vmatprep.subr.mxu0 0.0
        %425 = vmatpush1.xpose.msra.mxu0 0.0
        %426 = vmatprep.subr.mxu0 0.0
        %427 = vmatpush1.xpose.msra.mxu0 0.0
        %428 = vmatprep.subr.mxu0 0.0
        %429 = vmatpush1.xpose.msra.mxu0 0.0
        %430 = vmatprep.subr.mxu0 0.0
        %431 = vmatpush1.xpose.msra.mxu0 0.0
        %432 = vmatprep.subr.mxu0 0.0
        %433 = vmatpush1.xpose.msra.mxu0 0.0
        %434 = vmatprep.subr.mxu0 0.0
        %435 = vmatpush1.xpose.msra.mxu0 0.0
        %436 = vmatprep.subr.mxu0 0.0
        %437 = vmatpush1.xpose.msra.mxu0 0.0
        %438 = vmatprep.subr.mxu0 0.0
        %439 = vmatpush1.xpose.msra.mxu0 0.0
        %440 = vmatprep.subr.mxu0 0.0
        %441 = vmatpush1.xpose.msra.mxu0 0.0
        %442 = vmatprep.mubr.f32.mxu0 0.0
        %443 = vmatmul.mubr.f32.gmra.mrb[0].mxu0 %v367
        %v444 = vpop.f32.mrb[0].mxu0
        %v445 = vadd.f32 0.0, %v444
        %v446 = vpop.f32.mrb[0].mxu0
        %447 = vmatprep.mubr.f32.mxu0 0.0
        %448 = vmatmul.mubr.f32.gmra.mrb[0].mxu0 %v370
        %v449 = vpop.f32.mrb[0].mxu0
        %v450 = vadd.f32 0.0, %v449
        %v451 = vpop.f32.mrb[0].mxu0
        %452 = vdwg.mxu0
        %vm453 = vcmask 130048
        %v454 = vsel %vm453, %v445, -inf
        %455 = vmax.xlane.f32.xlu0 %v454
        %v456 = vpop.xlane.xlu0 %455
        %v457 = vsel %vm453, %v450, -inf
        %458 = vmax.xlane.f32.xlu0 %v457
        %v459 = vpop.xlane.xlu0 %458
        %v460 = vsub.f32 %v445, %v456
        %v461 = vsub.f32 %v450, %v459
        %v462 = vmul.f32 %v460, 1.442695
        %v463 = vpow.pop %v462
        %v464 = vmul.f32 %v461, 1.442695
        %v465 = vpow.pop %v464
        %v466 = vsel %vm453, %v463, 0.0
        %467 = vadd.xlane.f32.xlu0 %v466
        %v468 = vpop.xlane.xlu0 %467
        %v469 = vsel %vm453, %v465, 0.0
        %470 = vadd.xlane.f32.xlu0 %v469
        %v471 = vpop.xlane.xlu0 %470
        %v472 = vrcp.pop %v468
        %v473 = vrcp.pop %v471
        %v474 = vmul.f32 %v463, %v472
        %v475 = vmul.f32 %v465, %v473
        %v477 = vsel %vm453, %v474, 0
        %v480 = vsel %vm453, %v475, 0
        %482 = vmatprep.subr.mxu0 0.0
        %483 = vmatpush1.msra.mxu0 %v359
        %484 = vmatprep.subr.mxu0 0.0
        %485 = vmatpush1.msra.mxu0 %v360
        %486 = vmatprep.subr.mxu0 0.0
        %487 = vmatpush1.msra.mxu0 0.0
        %488 = vmatprep.subr.mxu0 0.0
        %489 = vmatpush1.msra.mxu0 0.0
        %490 = vmatprep.subr.mxu0 0.0
        %491 = vmatpush1.msra.mxu0 0.0
        %492 = vmatprep.subr.mxu0 0.0
        %493 = vmatpush1.msra.mxu0 0.0
        %494 = vmatprep.subr.mxu0 0.0
        %495 = vmatpush1.msra.mxu0 0.0
        %496 = vmatprep.subr.mxu0 0.0
        %497 = vmatpush1.msra.mxu0 0.0
        %498 = vmatprep.subr.mxu0 0.0
        %499 = vmatpush1.msra.mxu0 0.0
        %500 = vmatprep.subr.mxu0 0.0
        %501 = vmatpush1.msra.mxu0 0.0
        %502 = vmatprep.subr.mxu0 0.0
        %503 = vmatpush1.msra.mxu0 0.0
        %504 = vmatprep.subr.mxu0 0.0
        %505 = vmatpush1.msra.mxu0 0.0
        %506 = vmatprep.subr.mxu0 0.0
        %507 = vmatpush1.msra.mxu0 0.0
        %508 = vmatprep.subr.mxu0 0.0
        %509 = vmatpush1.msra.mxu0 0.0
        %510 = vmatprep.subr.mxu0 0.0
        %511 = vmatpush1.msra.mxu0 0.0
        %512 = vmatprep.subr.mxu0 0.0
        %513 = vmatpush1.msra.mxu0 0.0
        %514 = vmatprep.subr.mxu0 0.0
        %515 = vmatpush1.msra.mxu0 0.0
        %516 = vmatprep.subr.mxu0 0.0
        %517 = vmatpush1.msra.mxu0 0.0
        %518 = vmatprep.subr.mxu0 0.0
        %519 = vmatpush1.msra.mxu0 0.0
        %520 = vmatprep.subr.mxu0 0.0
        %521 = vmatpush1.msra.mxu0 0.0
        %522 = vmatprep.subr.mxu0 0.0
        %523 = vmatpush1.msra.mxu0 0.0
        %524 = vmatprep.subr.mxu0 0.0
        %525 = vmatpush1.msra.mxu0 0.0
        %526 = vmatprep.subr.mxu0 0.0
        %527 = vmatpush1.msra.mxu0 0.0
        %528 = vmatprep.subr.mxu0 0.0
        %529 = vmatpush1.msra.mxu0 0.0
        %530 = vmatprep.subr.mxu0 0.0
        %531 = vmatpush1.msra.mxu0 0.0
        %532 = vmatprep.subr.mxu0 0.0
        %533 = vmatpush1.msra.mxu0 0.0
        %534 = vmatprep.subr.mxu0 0.0
        %535 = vmatpush1.msra.mxu0 0.0
        %536 = vmatprep.subr.mxu0 0.0
        %537 = vmatpush1.msra.mxu0 0.0
        %538 = vmatprep.subr.mxu0 0.0
        %539 = vmatpush1.msra.mxu0 0.0
        %540 = vmatprep.subr.mxu0 0.0
        %541 = vmatpush1.msra.mxu0 0.0
        %542 = vmatprep.subr.mxu0 0.0
        %543 = vmatpush1.msra.mxu0 0.0
        %544 = vmatprep.subr.mxu0 0.0
        %545 = vmatpush1.msra.mxu0 0.0
        %546 = vmatprep.mubr.f32.mxu0 0.0
        %547 = vmatmul.mubr.f32.gmra.mrb[0].mxu0 %v477
        %v548 = vpop.f32.mrb[0].mxu0
        %v549 = vadd.f32 0.0, %v548
        %v550 = vpop.f32.mrb[0].mxu0
        %551 = vmatprep.mubr.f32.mxu0 0.0
        %552 = vmatmul.mubr.f32.gmra.mrb[0].mxu0 %v480
        %v553 = vpop.f32.mrb[0].mxu0
        %v554 = vadd.f32 0.0, %v553
        %v555 = vpop.f32.mrb[0].mxu0
        %556 = vdwg.mxu0
        %557 = vst.msk [vmem:[%s344] sm:$0xff] %vm365, %v549
        %558 = vst.msk [vmem:[%s344 + $0x8] sm:$0xff] %vm365, %v554
        %559 = vst.msk [vmem:[%s351] sm:$0xff] %vm453, %v474
        %560 = vst.msk [vmem:[%s351 + $0x8] sm:$0xff] %vm453, %v475
        %s561 = sand.u32 %s153, 1
        %s562 = scalar_lea.sflag [#allocation5], %s561
        %s563 = sand.u32 %s153, 1
        %s564 = smul.addr %s563, 16
        %s565 = scalar_lea.vmem [#allocation9], %s564
        %s566 = sand.u32 %s181, 1
        %s567 = scalar_lea.sflag [#allocation11], %s566
        %s568 = sand.u32 %s181, 1
        %s569 = smul.addr %s568, 16
        %s570 = scalar_lea.vmem [#allocation10], %s569
        // Predicated region
        $region49: #{tpu_custom_call.1} parent=35 // pred_check
          %p571 = pneg %p163
        $region50: #{tpu_custom_call.1} parent=35 // pred_check_branch
          %573 = sbr.rel (%p571) target = $region52
        $region51: #{tpu_custom_call.1} parent=35 // pred_region
          %s574 = smul.u32 2, %s35
          %s576 = ssub.s32 256, 256
          %577 = vsyncadd %s562, %s576
          %s578 = smul.addr %s34, 2
          %s579 = sadd.s32 %s574, %s578
          %s580 = smul.addr %s579, 128
          %s581 = scalar_lea.hbm %s4, %s580
          %s582 = sshll.u32 %s565, 4
          %s583 = int_to_ptr.vmem [resolvable:$true] %s582
          %588 = dma.vmem_to_hbm [thread:$0]  %s583, 256, %s581, %s562, 128, 128, 8
        $region52: #{tpu_custom_call.1} parent=35 // pred_fallthru
          _
        // Predicated region
        $region53: #{tpu_custom_call.1} parent=35 // pred_check
          %p589 = pneg %p191
        $region54: #{tpu_custom_call.1} parent=35 // pred_check_branch
          %591 = sbr.rel (%p589) target = $region56
        $region55: #{tpu_custom_call.1} parent=35 // pred_region
          %s592 = smul.u32 2, %s35
          %s594 = ssub.s32 256, 256
          %595 = vsyncadd %s567, %s594
          %s596 = smul.addr %s34, 2
          %s597 = sadd.s32 %s592, %s596
          %s598 = smul.addr %s597, 128
          %s599 = scalar_lea.hbm %s5, %s598
          %s600 = sshll.u32 %s570, 4
          %s601 = int_to_ptr.vmem [resolvable:$true] %s600
          %606 = dma.vmem_to_hbm [thread:$0]  %s601, 256, %s599, %s567, 128, 128, 8
        $region56: #{tpu_custom_call.1} parent=35 // pred_fallthru
          _
      $region36: #{tpu_custom_call.1} parent=5 // pred_fallthru
        _
      %p607 = scmp.le.s32.totalorder 2, %s25
      // Predicated region
      $region57: #{tpu_custom_call.1} parent=5 // pred_check
        %p608 = pneg %p607
      $region58: #{tpu_custom_call.1} parent=5 // pred_check_branch
        %610 = sbr.rel (%p608) target = $region60
      $region59: #{tpu_custom_call.1} parent=5 // pred_region
        %s611 = ssub.s32 %s25, 2
        // Predicated region
        $region61: #{tpu_custom_call.1} parent=59 // pred_check
          %p612 = pneg %p169
        $region62: #{tpu_custom_call.1} parent=59 // pred_check_branch
          %614 = sbr.rel (%p612) target = $region64
        $region63: #{tpu_custom_call.1} parent=59 // pred_region
          %s615 = sand.u32 %s154, 1
          %s616 = scalar_lea.sflag [#allocation5], %s615
          %s617 = sand.u32 %s154, 1
          %s618 = smul.addr %s617, 16
          %s619 = scalar_lea.vmem [#allocation9], %s618
          %620 = dma.done %s616, 256
        $region64: #{tpu_custom_call.1} parent=59 // pred_fallthru
          _
        // Predicated region
        $region65: #{tpu_custom_call.1} parent=59 // pred_check
          %p621 = pneg %p197
        $region66: #{tpu_custom_call.1} parent=59 // pred_check_branch
          %623 = sbr.rel (%p621) target = $region68
        $region67: #{tpu_custom_call.1} parent=59 // pred_region
          %s624 = sand.u32 %s182, 1
          %s625 = scalar_lea.sflag [#allocation11], %s624
          %s626 = sand.u32 %s182, 1
          %s627 = smul.addr %s626, 16
          %s628 = scalar_lea.vmem [#allocation10], %s627
          %629 = dma.done %s625, 256
        $region68: #{tpu_custom_call.1} parent=59 // pred_fallthru
          _
      $region60: #{tpu_custom_call.1} parent=5 // pred_fallthru
        _
    $region6: #{tpu_custom_call.1} parent=1 // loop_footer
      %s29 = sadd.s32 1, %s25
    $region7: #{tpu_custom_call.1} parent=1 // loop_footer_branch
      %24 = sbr.rel target = $region3
    $region8: #{tpu_custom_call.1} parent=1 // loop_exit
      _
    %630 = vsyncpa [#allocation4], 1
    %s631 = scalar_lea.sflag [#allocation4], 1
    %632 = vsyncpa %s631, 1
    %633 = vsyncpa [#allocation7], 1
    %s634 = scalar_lea.sflag [#allocation7], 1
    %635 = vsyncpa %s634, 1
    %636 = vsyncpa [#allocation5], 1
    %s637 = scalar_lea.sflag [#allocation5], 1
    %638 = vsyncpa %s637, 1
    %639 = vsyncpa [#allocation11], 1
    %s640 = scalar_lea.sflag [#allocation11], 1
    %641 = vsyncpa %s640, 1

</llo_original>
